<compile_context>
chip_gen: v7x
topology: tpu7x:2x2x1
jax: 0.10.0
libtpu: 0.0.40
codegen_flags: <defaults>
</compile_context>

<pallas_src>
import functools

import jax
import jax.numpy as jnp
from jax import lax
from jax.experimental import pallas as pl
from jax.experimental.pallas import tpu as pltpu

_LANE = 128
_DEFAULT_VMEM_CAP = 64 * 1024 * 1024  # conservative (v7x-sized) if query fails

# Test hook: force a ceiling on TK so the multi-step K accumulation path is
# exercised even at small shapes. Leave None in production.
_FORCE_MAX_TK = None


def _round_up(x, m):
    return ((x + m - 1) // m) * m


@functools.lru_cache(maxsize=1)
def _vmem_limit_bytes():
    """~85% of physical VMEM: ~54 MiB on v7x, ~108 MiB on v5e/v6e."""
    cap = _DEFAULT_VMEM_CAP
    try:
        cap = int(pltpu.get_tpu_info().vmem_capacity_bytes)
    except Exception:
        pass
    cap = max(cap, 32 * 1024 * 1024)
    return int(cap * 0.85)


def _min_sublane(dtype):
    return 16 if dtype == jnp.bfloat16 else 8


def _prep_features(x):
    """NCHW -> (Mp, Kp) feature matrix; no HBM copy when already aligned."""
    a, b, c, d = x.shape
    M, K = a * b, c * d

    dtype = x.dtype
    if dtype != jnp.float32 and dtype != jnp.bfloat16:
        dtype = jnp.float32
    feats = x.reshape(M, K).astype(dtype)  # reshape is free; astype is a no-op if same dtype

    sub = _min_sublane(dtype)
    if M % sub == 0:
        Mp = M
    elif M > 64:
        Mp = _round_up(M, _LANE)  # lane-dense accumulator stores for big M
    else:
        Mp = _round_up(M, sub)
    Kp = _round_up(max(K, _LANE), _LANE)

    if Mp != M or Kp != K:
        # Tail-only zero pad; padded rows/cols contribute zero gram entries.
        feats = jnp.pad(feats, ((0, Mp - M), (0, Kp - K)))
    return feats, M, K, Mp, Kp


def _pick_k_tiling(Kp, Mp, itemsize):
    """Largest 128-multiple TK dividing Kp that fits the VMEM budget."""
    vmem_limit = _vmem_limit_bytes()
    # Fixed residents: f32 (Mp,Mp) accumulator + 2x buffers for the constant-
    # index target block + slack for outputs / internal scratch.
    fixed = 3 * Mp * Mp * 4 + (1 << 20)
    budget = vmem_limit - fixed - (2 << 20)
    # Per 128-column slab: 2 feature buffers + allowance for a possible
    # Mosaic-materialized transpose of the NT dot operand (f32).
    per_slab = Mp * _LANE * (2 * itemsize + 4)
    max_units = max(budget // per_slab, 1)
    if _FORCE_MAX_TK is not None:
        max_units = max(min(max_units, _FORCE_MAX_TK // _LANE), 1)

    n_units = Kp // _LANE
    best = 1
    for cand in range(int(min(n_units, max_units)), 0, -1):
        if n_units % cand == 0:
            best = cand
            break
    return best * _LANE


def _feature_spec(Mp, TK, nk, itemsize):
    """Feature BlockSpec; deeper pipelining when tiles are small and numerous."""
    idx = lambda k: (0, k)
    if nk >= 4 and Mp * TK * itemsize <= (2 << 20):
        try:
            return pl.BlockSpec((Mp, TK), idx, pipeline_mode=pl.Buffered(3))
        except Exception:
            pass
    return pl.BlockSpec((Mp, TK), idx)


def _compiler_params():
    return pltpu.CompilerParams(
        dimension_semantics=("arbitrary",),  # K is a reduction axis
        vmem_limit_bytes=_vmem_limit_bytes(),
    )


def _gram_kernel(f_ref, g_ref, *, inv_norm):
    """G = (F @ F^T) * inv_norm, K-tiled, accumulated in the resident output."""
    k = pl.program_id(0)

    @pl.when(k == 0)
    def _():
        g_ref[...] = jnp.zeros_like(g_ref)

    f = f_ref[...]
    # NT-form: contract both operands on the lane axis; MXU accumulates in f32.
    g_ref[...] += lax.dot_general(
        f, f,
        dimension_numbers=(((1,), (1,)), ((), ())),
        preferred_element_type=jnp.float32)

    @pl.when(k == pl.num_programs(0) - 1)
    def _():
        g_ref[...] = g_ref[...] * inv_norm


def _style_loss_kernel(f_ref, tgt_ref, loss_ref, acc_ref, *, inv_norm, inv_mse):
    """loss = mean((gram(F) - target)^2); gram K-tiled into a VMEM accumulator."""
    k = pl.program_id(0)

    @pl.when(k == 0)
    def _():
        acc_ref[...] = jnp.zeros_like(acc_ref)

    f = f_ref[...]
    acc_ref[...] += lax.dot_general(
        f, f,
        dimension_numbers=(((1,), (1,)), ((), ())),
        preferred_element_type=jnp.float32)

    @pl.when(k == pl.num_programs(0) - 1)
    def _():
        diff = acc_ref[...] * inv_norm - tgt_ref[...]
        loss_ref[...] = jnp.sum(diff * diff, keepdims=True) * inv_mse


@jax.jit
def gram_matrix_pallas(x):
    """Pallas equivalent of gram_matrix(input) for NCHW input x (f32 result)."""
    a, b, c, d = x.shape
    feats, M, K, Mp, Kp = _prep_features(x)
    itemsize = jnp.dtype(feats.dtype).itemsize
    TK = _pick_k_tiling(Kp, Mp, itemsize)
    nk = Kp // TK
    inv_norm = 1.0 / float(a * b * c * d)

    gram = pl.pallas_call(
        functools.partial(_gram_kernel, inv_norm=inv_norm),
        out_shape=jax.ShapeDtypeStruct((Mp, Mp), jnp.float32),
        grid_spec=pltpu.PrefetchScalarGridSpec(
            num_scalar_prefetch=0,
            grid=(nk,),
            in_specs=[_feature_spec(Mp, TK, nk, itemsize)],
            out_specs=pl.BlockSpec((Mp, Mp), lambda k: (0, 0)),
        ),
        compiler_params=_compiler_params(),
    )(feats)
    if Mp != M:
        gram = gram[:M, :M]
    return gram


@jax.jit
def style_loss_pallas(x, target_gram):
    """Returns mse_loss(gram_matrix(x), target_gram) as a scalar."""
    a, b, c, d = x.shape
    feats, M, K, Mp, Kp = _prep_features(x)
    itemsize = jnp.dtype(feats.dtype).itemsize
    TK = _pick_k_tiling(Kp, Mp, itemsize)
    nk = Kp // TK
    inv_norm = 1.0 / float(a * b * c * d)
    inv_mse = 1.0 / float(M * M)

    tgt = target_gram.astype(jnp.float32)
    if Mp != M:
        # Padded gram rows/cols are zero (zero feature rows), so pad target
        # with zeros too; the diff there is exactly zero -> loss-neutral.
        tgt = jnp.pad(tgt, ((0, Mp - M), (0, Mp - M)))

    loss = pl.pallas_call(
        functools.partial(_style_loss_kernel, inv_norm=inv_norm, inv_mse=inv_mse),
        out_shape=jax.ShapeDtypeStruct((1, 1), jnp.float32),
        grid_spec=pltpu.PrefetchScalarGridSpec(
            num_scalar_prefetch=0,
            grid=(nk,),
            in_specs=[
                _feature_spec(Mp, TK, nk, itemsize),      # K-tiled feature stream
                pl.BlockSpec((Mp, Mp), lambda k: (0, 0)),  # target: DMA'd once
            ],
            out_specs=pl.BlockSpec((1, 1), lambda k: (0, 0)),
            scratch_shapes=[pltpu.VMEM((Mp, Mp), jnp.float32)],
        ),
        compiler_params=_compiler_params(),
    )(feats, tgt)
    return loss[0, 0]


class StyleLoss:
    """JAX/Pallas port of the PyTorch StyleLoss module."""

    def __init__(self, target_feature):
        # target gram computed once at init ("detached" constant).
        self.target = gram_matrix_pallas(target_feature)
        self.loss = None

    def forward(self, x):
        self.loss = style_loss_pallas(x, self.target)
        return x  # module returns its input unchanged

    __call__ = forward


def _reference_loss(x, target_feature):
    """Pure-JAX reference for verification."""
    def gram(t):
        a, b, c, d = t.shape
        f = t.reshape(a * b, c * d).astype(jnp.float32)
        return (f @ f.T) / float(a * b * c * d)

    g = gram(x)
    tg = gram(target_feature)
    return jnp.mean((g - tg) ** 2)


if __name__ == "__main__":
    key = jax.random.PRNGKey(0)
    k_tgt, k_in, k_tgt2, k_in2, k_tgt3, k_in3 = jax.random.split(key, 6)

    # 1) Aligned NCHW shapes (M=8, K=256): zero-copy prep path, single K tile.
    target_feature = jax.random.normal(k_tgt, (2, 4, 16, 16), dtype=jnp.float32)
    x = jax.random.normal(k_in, (2, 4, 16, 16), dtype=jnp.float32)

    module = StyleLoss(target_feature)
    out = module(x)
    jax.block_until_ready(out)
    jax.block_until_ready(module.loss)

    ref = _reference_loss(x, target_feature)
    assert jnp.allclose(module.loss, ref, rtol=1e-5, atol=1e-5), (module.loss, ref)
    assert out.shape == x.shape and jnp.array_equal(out, x)

    # 2) Force a small TK to exercise the multi-step K-tiled accumulation and
    #    the Buffered(3) pipeline path (K = 48*64 = 3072 -> 24 tiles of 128).
    _FORCE_MAX_TK = 128
    target_feature2 = jax.random.normal(k_tgt2, (1, 8, 48, 64), dtype=jnp.float32)
    x2 = jax.random.normal(k_in2, (1, 8, 48, 64), dtype=jnp.float32)
    module2 = StyleLoss(target_feature2)
    out2 = module2(x2)
    jax.block_until_ready(out2)
    jax.block_until_ready(module2.loss)
    ref2 = _reference_loss(x2, target_feature2)
    assert jnp.allclose(module2.loss, ref2, rtol=1e-5, atol=1e-5), (module2.loss, ref2)
    _FORCE_MAX_TK = None

    # 3) Misaligned shapes (M=3, K=150) exercise the tail-pad fallback path.
    target_feature3 = jax.random.normal(k_tgt3, (1, 3, 10, 15), dtype=jnp.float32)
    x3 = jax.random.normal(k_in3, (1, 3, 10, 15), dtype=jnp.float32)
    module3 = StyleLoss(target_feature3)
    out3 = module3(x3)
    jax.block_until_ready(out3)
    jax.block_until_ready(module3.loss)
    ref3 = _reference_loss(x3, target_feature3)
    assert jnp.allclose(module3.loss, ref3, rtol=1e-5, atol=1e-5), (module3.loss, ref3)

    print("KERNEL_OK")
</pallas_src>

<mosaic_0001>
module attributes {stable_mosaic.version = 11 : i64} {
  func.func @_gram_kernel(%arg0: i32, %arg1: memref<8x256xf32, #tpu.memory_space<vmem>>, %arg2: memref<8x8xf32, #tpu.memory_space<vmem>>) attributes {dimension_semantics = [#tpu.dimension_semantics<arbitrary>], iteration_bounds = array<i64: 1>, scalar_prefetch = 0 : i64, scratch_operands = 0 : i64, tpu.core_type = #tpu.core_type<tc>, window_params = [{transform_indices = @transform_0, window_bounds = array<i64: 8, 256>}, {pipeline_mode = #tpu.pipeline_mode<synchronous>, transform_indices = @transform_1, window_bounds = array<i64: 8, 8>}]} {
    %c0_i32 = arith.constant 0 : i32
    %0 = arith.cmpi eq, %arg0, %c0_i32 : i32
    %1 = arith.extui %0 : i1 to i32
    %c0_i32_0 = arith.constant 0 : i32
    %2 = arith.cmpi ne, %1, %c0_i32_0 : i32
    scf.if %2 {
      %cst_8 = arith.constant 0.000000e+00 : f32
      %11 = vector.broadcast %cst_8 : f32 to vector<8x8xf32>
      %c0_9 = arith.constant 0 : index
      %c0_10 = arith.constant 0 : index
      %12 = vector.load %arg2[%c0_9, %c0_10] : memref<8x8xf32, #tpu.memory_space<vmem>>, vector<8x8xf32>
      tpu.vector_store %arg2[%c0_9, %c0_10], %11 {strides = array<i32>} : memref<8x8xf32, #tpu.memory_space<vmem>>, vector<8x8xf32>,
    } else {
    }
    %c0 = arith.constant 0 : index
    %c0_1 = arith.constant 0 : index
    %3 = vector.load %arg1[%c0, %c0_1] : memref<8x256xf32, #tpu.memory_space<vmem>>, vector<8x256xf32>
    %c0_2 = arith.constant 0 : index
    %c0_3 = arith.constant 0 : index
    %4 = vector.load %arg2[%c0_2, %c0_3] : memref<8x8xf32, #tpu.memory_space<vmem>>, vector<8x8xf32>
    %cst = arith.constant dense<0.000000e+00> : vector<8x8xf32>
    %5 = tpu.matmul %3, %3, %cst {dimension_numbers = #tpu.dot_dimension_numbers<[1], [1], [0], [0], [0, 0, 1, 0], [], []>} : vector<8x256xf32>, vector<8x256xf32>, vector<8x8xf32> -> vector<8x8xf32>
    %6 = arith.addf %4, %5 : vector<8x8xf32>
    %c0_4 = arith.constant 0 : index
    %c0_5 = arith.constant 0 : index
    %7 = vector.load %arg2[%c0_4, %c0_5] : memref<8x8xf32, #tpu.memory_space<vmem>>, vector<8x8xf32>
    tpu.vector_store %arg2[%c0_4, %c0_5], %6 {strides = array<i32>} : memref<8x8xf32, #tpu.memory_space<vmem>>, vector<8x8xf32>,
    %c0_i32_6 = arith.constant 0 : i32
    %8 = arith.cmpi eq, %arg0, %c0_i32_6 : i32
    %9 = arith.extui %8 : i1 to i32
    %c0_i32_7 = arith.constant 0 : i32
    %10 = arith.cmpi ne, %9, %c0_i32_7 : i32
    scf.if %10 {
      %c0_8 = arith.constant 0 : index
      %c0_9 = arith.constant 0 : index
      %11 = vector.load %arg2[%c0_8, %c0_9] : memref<8x8xf32, #tpu.memory_space<vmem>>, vector<8x8xf32>
      %cst_10 = arith.constant 4.8828125E-4 : f32
      %12 = vector.broadcast %cst_10 : f32 to vector<8x8xf32>
      %13 = arith.mulf %11, %12 : vector<8x8xf32>
      %c0_11 = arith.constant 0 : index
      %c0_12 = arith.constant 0 : index
      %14 = vector.load %arg2[%c0_11, %c0_12] : memref<8x8xf32, #tpu.memory_space<vmem>>, vector<8x8xf32>
      tpu.vector_store %arg2[%c0_11, %c0_12], %13 {strides = array<i32>} : memref<8x8xf32, #tpu.memory_space<vmem>>, vector<8x8xf32>,
    } else {
    }
    return
  }
  func.func @transform_0(%arg0: i32) -> (i32, i32) {
    %c0_i32 = arith.constant 0 : i32
    %c0_i32_0 = arith.constant 0 : i32
    return %c0_i32, %arg0 : i32, i32
  }
  func.func @transform_1(%arg0: i32) -> (i32, i32) {
    %c0_i32 = arith.constant 0 : i32
    %c0_i32_0 = arith.constant 0 : i32
    %c0_i32_1 = arith.constant 0 : i32
    return %c0_i32, %c0_i32_0 : i32, i32
  }
}

</mosaic_0001>

<llo_original>
// kernel: gram_matrix_pallas.1
$region0: #{gram_matrix_pallas.1}
  #allocation0 [shape = 'u32[]', space=smem, size = 0x4, offset = 0x4, fixed_abs, tag = 'smem constant byte address 0x4 - core index']
  #allocation1 [shape = 'u32[144,128]{1,0:T(1,128)}', space=vmem, size = 0x12000, scoped, tag = 'internal scratch']
  %s0 = inlined_call_operand.vmem [shape: f32[8,256], index: 0, kind: input, shape index: {}]
  %s1 = inlined_call_operand.hbm [shape: f32[8,8], index: 1, kind: output, shape index: {}]
  %s2 = sld [smem:[#allocation0]]
  $region22: #{gram_matrix_pallas.1} parent=0
    _
  %s4 = ssub.s32 1, %s2
  %s5 = scalar_select 0, %s4, %s2
  $region1: #{gram_matrix_pallas.1} parent=0
    #allocation2 [shape = 'u8[4096]{0}', space=vmem, size = 0x1000, scoped, tag = 'output window, operand 0, single buffered']
    #allocation3 [shape = 's32[1]{0}', space=sflag, size = 0x4, scoped, tag = 'scoped memory for gram_matrix_pallas.1']
    %6 = vsyncpa [#allocation3], 0
    // Predicated region
    $region2: #{gram_matrix_pallas.1} parent=1 // pred_check
      _
    $region3: #{gram_matrix_pallas.1} parent=1 // pred_check_branch
      %8 = sbr.rel (0) target = $region5
    $region4: #{gram_matrix_pallas.1} parent=1 // pred_region
      _
    $region5: #{gram_matrix_pallas.1} parent=1 // pred_fallthru
      _
    %p9 = scmp.eq.s32.totalorder 0, 0
    // Predicated region
    $region6: #{gram_matrix_pallas.1} parent=1 // pred_check
      %p10 = pneg %p9
    $region7: #{gram_matrix_pallas.1} parent=1 // pred_check_branch
      %12 = sbr.rel (%p10) target = $region9
    $region8: #{gram_matrix_pallas.1} parent=1 // pred_region
      %vm13 = vcmask 64512
      %14 = vst.msk [vmem:[#allocation2] sm:$0xff] %vm13, 0.0
    $region9: #{gram_matrix_pallas.1} parent=1 // pred_fallthru
      _
    %v15 = vld [vmem:[%s0] sm:$0xff]
    %v16 = vld [vmem:[%s0 + $0x8] sm:$0xff]
    %v17 = vld [vmem:[#allocation2] sm:$0xff]
    %18 = vmatprep.subr.mxu0 %v16
    %19 = vmatpush1.xpose.msra.mxu0 %v15
    %20 = vmatprep.subr.mxu0 0.0
    %21 = vmatpush1.xpose.msra.mxu0 0.0
    %22 = vmatprep.subr.mxu0 0.0
    %23 = vmatpush1.xpose.msra.mxu0 0.0
    %24 = vmatprep.subr.mxu0 0.0
    %25 = vmatpush1.xpose.msra.mxu0 0.0
    %26 = vmatprep.subr.mxu0 0.0
    %27 = vmatpush1.xpose.msra.mxu0 0.0
    %28 = vmatprep.subr.mxu0 0.0
    %29 = vmatpush1.xpose.msra.mxu0 0.0
    %30 = vmatprep.subr.mxu0 0.0
    %31 = vmatpush1.xpose.msra.mxu0 0.0
    %32 = vmatprep.subr.mxu0 0.0
    %33 = vmatpush1.xpose.msra.mxu0 0.0
    %34 = vmatprep.subr.mxu0 0.0
    %35 = vmatpush1.xpose.msra.mxu0 0.0
    %36 = vmatprep.subr.mxu0 0.0
    %37 = vmatpush1.xpose.msra.mxu0 0.0
    %38 = vmatprep.subr.mxu0 0.0
    %39 = vmatpush1.xpose.msra.mxu0 0.0
    %40 = vmatprep.subr.mxu0 0.0
    %41 = vmatpush1.xpose.msra.mxu0 0.0
    %42 = vmatprep.subr.mxu0 0.0
    %43 = vmatpush1.xpose.msra.mxu0 0.0
    %44 = vmatprep.subr.mxu0 0.0
    %45 = vmatpush1.xpose.msra.mxu0 0.0
    %46 = vmatprep.subr.mxu0 0.0
    %47 = vmatpush1.xpose.msra.mxu0 0.0
    %48 = vmatprep.subr.mxu0 0.0
    %49 = vmatpush1.xpose.msra.mxu0 0.0
    %50 = vmatprep.subr.mxu0 0.0
    %51 = vmatpush1.xpose.msra.mxu0 0.0
    %52 = vmatprep.subr.mxu0 0.0
    %53 = vmatpush1.xpose.msra.mxu0 0.0
    %54 = vmatprep.subr.mxu0 0.0
    %55 = vmatpush1.xpose.msra.mxu0 0.0
    %56 = vmatprep.subr.mxu0 0.0
    %57 = vmatpush1.xpose.msra.mxu0 0.0
    %58 = vmatprep.subr.mxu0 0.0
    %59 = vmatpush1.xpose.msra.mxu0 0.0
    %60 = vmatprep.subr.mxu0 0.0
    %61 = vmatpush1.xpose.msra.mxu0 0.0
    %62 = vmatprep.subr.mxu0 0.0
    %63 = vmatpush1.xpose.msra.mxu0 0.0
    %64 = vmatprep.subr.mxu0 0.0
    %65 = vmatpush1.xpose.msra.mxu0 0.0
    %66 = vmatprep.subr.mxu0 0.0
    %67 = vmatpush1.xpose.msra.mxu0 0.0
    %68 = vmatprep.subr.mxu0 0.0
    %69 = vmatpush1.xpose.msra.mxu0 0.0
    %70 = vmatprep.subr.mxu0 0.0
    %71 = vmatpush1.xpose.msra.mxu0 0.0
    %72 = vmatprep.subr.mxu0 0.0
    %73 = vmatpush1.xpose.msra.mxu0 0.0
    %74 = vmatprep.subr.mxu0 0.0
    %75 = vmatpush1.xpose.msra.mxu0 0.0
    %76 = vmatprep.subr.mxu0 0.0
    %77 = vmatpush1.xpose.msra.mxu0 0.0
    %78 = vmatprep.subr.mxu0 0.0
    %79 = vmatpush1.xpose.msra.mxu0 0.0
    %80 = vmatprep.subr.mxu0 0.0
    %81 = vmatpush1.xpose.msra.mxu0 0.0
    %82 = vmatprep.mubr.f32.mxu0 %v16
    %83 = vmatmul.mubr.f32.gmra.mrb[0].mxu0 %v15
    %v84 = vpop.f32.mrb[0].mxu0
    %v85 = vadd.f32 0.0, %v84
    %v86 = vpop.f32.mrb[0].mxu0
    %87 = vdwg.mxu0
    %v88 = vadd.f32 %v17, %v85
    %vm89 = vcmask 64512
    %90 = vst.msk [vmem:[#allocation2] sm:$0xff] %vm89, %v88
    // Predicated region
    $region10: #{gram_matrix_pallas.1} parent=1 // pred_check
      %p91 = pneg %p9
    $region11: #{gram_matrix_pallas.1} parent=1 // pred_check_branch
      %93 = sbr.rel (%p91) target = $region13
    $region12: #{gram_matrix_pallas.1} parent=1 // pred_region
      %v94 = vld [vmem:[#allocation2] sm:$0xff]
      %v95 = vmul.f32 %v94, 0.00048828125
      %96 = vst.msk [vmem:[#allocation2] sm:$0xff] %vm89, %v95
    $region13: #{gram_matrix_pallas.1} parent=1 // pred_fallthru
      _
    // Predicated region
    $region14: #{gram_matrix_pallas.1} parent=1 // pred_check
      _
    $region15: #{gram_matrix_pallas.1} parent=1 // pred_check_branch
      %98 = sbr.rel (0) target = $region17
    $region16: #{gram_matrix_pallas.1} parent=1 // pred_region
      %s100 = ssub.s32 128, 128
      %101 = vsyncadd [#allocation3], %s100
      %s103 = sshll.u32 [#allocation2], 4
      %s104 = int_to_ptr.vmem [resolvable:$true] %s103
      %106 = dma.vmem_to_hbm [thread:$0]  %s104, 128, %s1, [#allocation3]
    $region17: #{gram_matrix_pallas.1} parent=1 // pred_fallthru
      _
    // Predicated region
    $region18: #{gram_matrix_pallas.1} parent=1 // pred_check
      _
    $region19: #{gram_matrix_pallas.1} parent=1 // pred_check_branch
      %108 = sbr.rel (0) target = $region21
    $region20: #{gram_matrix_pallas.1} parent=1 // pred_region
      %109 = dma.done [#allocation3], 128
    $region21: #{gram_matrix_pallas.1} parent=1 // pred_fallthru
      _
    %110 = vsyncpa [#allocation3], 1

</llo_original>
